<compile_context>
chip_gen: v5e
topology: v5e:2x2
jax: 0.10.0
libtpu: 0.0.40
codegen_flags: <defaults>
</compile_context>

<pallas_src>
import math

import jax
import jax.numpy as jnp
from jax import lax
from jax.experimental import pallas as pl
from jax.experimental.pallas import tpu as pltpu

# ----------------------- model dims (small, synthetic) -----------------------
B, S, D = 2, 8, 32          # batch, seq, d_model
H = 4                       # heads
DH = D // H                 # head dim
F = 64                      # position-wise FF hidden dim
EPS = 1e-5                  # nn.LayerNorm default eps
BS = B * S                  # fused (batch*seq) rows = 16
COLS = H * B * S            # fused score columns = 64, ordered (head, batch, key_pos)
NEG = -1e9


def _layernorm(x, gamma, beta):
    # var = E[x^2] - E[x]^2: the two XLU reductions are independent (shorter
    # dependency chain than E[(x-mean)^2]); fine numerically at D=32 / unit scale.
    m = jnp.mean(x, axis=-1, keepdims=True)
    m2 = jnp.mean(x * x, axis=-1, keepdims=True)
    var = m2 - m * m
    return (x - m) * lax.rsqrt(var + EPS) * gamma + beta


def _bf16_dot(a, b):
    # MXU-native bf16 operands, f32 accumulation.
    return jnp.dot(a.astype(jnp.bfloat16), b.astype(jnp.bfloat16),
                   preferred_element_type=jnp.float32)


def encoder_block_kernel(x_ref, bias_ref, wqkv_ref, wo_ref, w1_ref, w2_ref,
                         vec_ref, sel_ref, seg_ref, out_ref):
    x = x_ref[...].astype(jnp.float32)                 # (BS, D)

    # Packed small params: one parameter per sublane row, all starting at lane 0.
    # Static ref slices -> plain sub-tile loads, no lane rotates.
    b_qkv = vec_ref[0:1, 0:3 * D]                      # (1, 3D) [bq | bk | bv]
    bo    = vec_ref[1:2, 0:D]
    g1    = vec_ref[2:3, 0:D]
    be1   = vec_ref[3:4, 0:D]
    g2    = vec_ref[4:5, 0:D]
    be2   = vec_ref[5:6, 0:D]
    b1    = vec_ref[6:7, 0:F]
    b2    = vec_ref[7:8, 0:D]

    # ---------------- residual 1: x + MHA(LN(x)) ----------------
    ln1 = _layernorm(x, g1, be1)
    qkv = _bf16_dot(ln1, wqkv_ref[...]) + b_qkv        # (BS, 3D) f32

    scale = 1.0 / math.sqrt(DH)
    q = qkv[:, 0:D] * scale                            # fold 1/sqrt(dh) into q
    k = qkv[:, D:2 * D]
    v = qkv[:, 2 * D:3 * D]

    # Block-diagonal over (head, batch): all B*H softmaxes in 3 matmuls.
    # Rows of k_rep/v_rep (= score columns) are ordered (head, batch, key_pos).
    sel = sel_ref[...]                                 # (COLS, D) f32 head selector
    k_rep = jnp.concatenate([k] * H, axis=0)           # (COLS, D)
    v_rep = jnp.concatenate([v] * H, axis=0)
    # f32 multiply then cast (safe on v5e's f32-only VALU), operands land as bf16.
    k_bd = (k_rep * sel).astype(jnp.bfloat16)
    v_bd = (v_rep * sel).astype(jnp.bfloat16)

    # scores[r, c] = q_head(c)[r] . k_head(c)[batch(c), pos(c)]
    # (single MXU pass; rhs-contracting-dim-1 is the MXU-native transposed-rhs form)
    s = lax.dot_general(q.astype(jnp.bfloat16), k_bd,
                        (((1,), (1,)), ((), ())),
                        preferred_element_type=jnp.float32)     # (BS, COLS)
    s = s + bias_ref[...]      # additive mask; also kills cross-batch columns

    # Global per-row max is a valid per-segment softmax shift (scores are O(1)
    # here, so no valid segment can underflow entirely).
    s = s - jnp.max(s, axis=-1, keepdims=True)
    p = jnp.exp(s)

    # Per-(head, batch) segment sums via one bf16 matmul.
    denom = jnp.dot(p.astype(jnp.bfloat16), seg_ref[...],
                    preferred_element_type=jnp.float32)          # (BS, COLS)
    recip = pl.reciprocal(denom, approx=True)
    # Fully masked segments (cross-batch columns) have denom == 0: guard so the
    # context matmul never sees 0 * inf NaNs.
    recip = jnp.where(denom > 0.0, recip, 0.0)
    p = p * recip

    ctx = _bf16_dot(p, v_bd)                                     # (BS, D)
    x = x + _bf16_dot(ctx, wo_ref[...]) + bo

    # ---------------- residual 2: x + FFN(LN(x)) ----------------
    ln2 = _layernorm(x, g2, be2)
    h1 = jnp.maximum(_bf16_dot(ln2, w1_ref[...]) + b1, 0.0)
    x = x + _bf16_dot(h1, w2_ref[...]) + b2

    out_ref[...] = x.astype(out_ref.dtype)


# ----------------------- one-time prepacking (out of the hot path) -----------------------
def pack_params(params):
    """Pack PyTorch-style params into the kernel-resident form (call once)."""
    wqkv = jnp.concatenate([params["wq"], params["wk"], params["wv"]],
                           axis=1).astype(jnp.bfloat16)          # (D, 3D)
    wo = params["wo"].astype(jnp.bfloat16)                       # (D, D)
    w1 = params["w1"].astype(jnp.bfloat16)                       # (D, F)
    w2 = params["w2"].astype(jnp.bfloat16)                       # (F, D)

    def row(vals, width=128):
        r = jnp.concatenate(vals, axis=1)
        return jnp.pad(r, ((0, 0), (0, width - r.shape[1])))

    vec = jnp.concatenate([
        row([params["bq"], params["bk"], params["bv"]]),          # row 0: b_qkv
        row([params["bo"]]),                                      # row 1
        row([params["g1"]]),                                      # row 2
        row([params["be1"]]),                                     # row 3
        row([params["g2"]]),                                      # row 4
        row([params["be2"]]),                                     # row 5
        row([params["b1"]]),                                      # row 6
        row([params["b2"]]),                                      # row 7
    ], axis=0).astype(jnp.float32)                                # (8, 128)

    # Head selector for block-diagonal K/V (score columns ordered (h, b, j)).
    col_head = jnp.arange(COLS) // (B * S)
    feat_head = jnp.arange(D) // DH
    sel = (col_head[:, None] == feat_head[None, :]).astype(jnp.float32)   # (COLS, D)

    # Segment matrix: 1 iff two columns share the same (head, batch) group.
    cid = jnp.arange(COLS) // S
    seg = (cid[:, None] == cid[None, :]).astype(jnp.bfloat16)             # (COLS, COLS)

    return dict(wqkv=wqkv, wo=wo, w1=w1, w2=w2, vec=vec, sel=sel, seg=seg)


def make_attention_bias(mask):
    """mask: (B, S, S), 1=keep. Returns (BS, COLS) additive bias for the fused
    score matrix; cross-batch columns are also masked (set to -1e9)."""
    keep = mask > 0                                               # (Bq, Si, Sj)
    same = jnp.eye(B, dtype=bool)                                 # (Bq, Bk)
    full = keep[:, :, None, None, :] & same[:, None, None, :, None]  # (Bq,Si,1,Bk,Sj)
    full = jnp.broadcast_to(full, (B, S, H, B, S)).reshape(BS, COLS)
    return jnp.where(full, 0.0, NEG).astype(jnp.float32)


def encoder_block(x, bias, packed):
    """x: (B, S, D) f32, bias: (BS, COLS) additive mask, packed: pack_params(...)"""
    assert x.shape == (B, S, D)
    x2 = x.reshape(BS, D)
    vmem = lambda: pl.BlockSpec(memory_space=pltpu.MemorySpace.VMEM)
    out2 = pl.pallas_call(
        encoder_block_kernel,
        out_shape=jax.ShapeDtypeStruct((BS, D), x.dtype),
        in_specs=[vmem() for _ in range(9)],
        out_specs=vmem(),
    )(x2, bias, packed["wqkv"], packed["wo"], packed["w1"], packed["w2"],
      packed["vec"], packed["sel"], packed["seg"])
    return out2.reshape(B, S, D)


# ----------------------- pure-JAX f32 reference for validation -----------------------
def encoder_block_ref(x, mask, p):
    def ln(z, g, b):
        m = jnp.mean(z, -1, keepdims=True)
        v = jnp.mean((z - m) ** 2, -1, keepdims=True)
        return (z - m) / jnp.sqrt(v + EPS) * g + b

    ln1 = ln(x, p["g1"], p["be1"])
    q = ln1 @ p["wq"] + p["bq"]
    k = ln1 @ p["wk"] + p["bk"]
    v = ln1 @ p["wv"] + p["bv"]
    qh = q.reshape(B, S, H, DH).transpose(0, 2, 1, 3)
    kh = k.reshape(B, S, H, DH).transpose(0, 2, 1, 3)
    vh = v.reshape(B, S, H, DH).transpose(0, 2, 1, 3)
    s = jnp.einsum("bhqd,bhkd->bhqk", qh, kh) / math.sqrt(DH)
    s = jnp.where(mask[:, None, :, :] > 0, s, -1e9)
    a = jax.nn.softmax(s, axis=-1)
    o = jnp.einsum("bhqk,bhkd->bhqd", a, vh).transpose(0, 2, 1, 3).reshape(B, S, D)
    x = x + (o @ p["wo"] + p["bo"])
    ln2 = ln(x, p["g2"], p["be2"])
    h = jnp.maximum(ln2 @ p["w1"] + p["b1"], 0.0)
    return x + (h @ p["w2"] + p["b2"])


if __name__ == "__main__":
    key = jax.random.PRNGKey(0)
    keys = jax.random.split(key, 16)

    def init(k, shape, scale=0.1):
        return jax.random.normal(k, shape, jnp.float32) * scale

    params = {
        "wq": init(keys[0], (D, D)), "bq": init(keys[1], (1, D)),
        "wk": init(keys[2], (D, D)), "bk": init(keys[3], (1, D)),
        "wv": init(keys[4], (D, D)), "bv": init(keys[5], (1, D)),
        "wo": init(keys[6], (D, D)), "bo": init(keys[7], (1, D)),
        "g1": jnp.ones((1, D), jnp.float32), "be1": jnp.zeros((1, D), jnp.float32),
        "w1": init(keys[8], (D, F)), "b1": init(keys[9], (1, F)),
        "w2": init(keys[10], (F, D)), "b2": init(keys[11], (1, D)),
        "g2": jnp.ones((1, D), jnp.float32), "be2": jnp.zeros((1, D), jnp.float32),
    }

    x = jax.random.normal(keys[12], (B, S, D), jnp.float32)
    # padding-style mask: batch 1 has its last 2 key positions masked out
    mask = jnp.ones((B, S, S), jnp.float32)
    mask = mask.at[1, :, S - 2:].set(0.0)

    # One-time prepacking (kept out of the jit'd per-call hot path).
    packed = jax.tree_util.tree_map(jax.block_until_ready, pack_params(params))
    bias = jax.block_until_ready(make_attention_bias(mask))

    out = jax.block_until_ready(jax.jit(encoder_block)(x, bias, packed))
    ref = encoder_block_ref(x, mask, params)

    assert out.shape == (B, S, D)
    # bf16 matmul operands + approx softmax reciprocal -> relaxed tolerance vs f32 ref.
    err = jnp.max(jnp.abs(out - ref))
    assert jnp.allclose(out, ref, atol=2e-2, rtol=2e-2), f"max abs err {err}"
    assert not jnp.any(jnp.isnan(out)), "NaN in kernel output"

    print("KERNEL_OK")
</pallas_src>

<mosaic_0001>
module attributes {stable_mosaic.version = 11 : i64} {
  func.func @encoder_block_kernel(%arg0: memref<16x32xf32, #tpu.memory_space<vmem>>, %arg1: memref<16x64xf32, #tpu.memory_space<vmem>>, %arg2: memref<32x96xbf16, #tpu.memory_space<vmem>>, %arg3: memref<32x32xbf16, #tpu.memory_space<vmem>>, %arg4: memref<32x64xbf16, #tpu.memory_space<vmem>>, %arg5: memref<64x32xbf16, #tpu.memory_space<vmem>>, %arg6: memref<8x128xf32, #tpu.memory_space<vmem>>, %arg7: memref<64x32xf32, #tpu.memory_space<vmem>>, %arg8: memref<64x64xbf16, #tpu.memory_space<vmem>>, %arg9: memref<16x32xf32, #tpu.memory_space<vmem>>) attributes {dimension_semantics = [], scalar_prefetch = 0 : i64, scratch_operands = 0 : i64, tpu.core_type = #tpu.core_type<tc>} {
    %c0 = arith.constant 0 : index
    %c0_0 = arith.constant 0 : index
    %0 = vector.load %arg0[%c0, %c0_0] : memref<16x32xf32, #tpu.memory_space<vmem>>, vector<16x32xf32>
    %c0_1 = arith.constant 0 : index
    %c0_2 = arith.constant 0 : index
    %1 = vector.load %arg6[%c0_1, %c0_2] : memref<8x128xf32, #tpu.memory_space<vmem>>, vector<1x96xf32>
    %c1 = arith.constant 1 : index
    %c0_3 = arith.constant 0 : index
    %2 = vector.load %arg6[%c1, %c0_3] : memref<8x128xf32, #tpu.memory_space<vmem>>, vector<1x32xf32>
    %c2 = arith.constant 2 : index
    %c0_4 = arith.constant 0 : index
    %3 = vector.load %arg6[%c2, %c0_4] : memref<8x128xf32, #tpu.memory_space<vmem>>, vector<1x32xf32>
    %c3 = arith.constant 3 : index
    %c0_5 = arith.constant 0 : index
    %4 = vector.load %arg6[%c3, %c0_5] : memref<8x128xf32, #tpu.memory_space<vmem>>, vector<1x32xf32>
    %c4 = arith.constant 4 : index
    %c0_6 = arith.constant 0 : index
    %5 = vector.load %arg6[%c4, %c0_6] : memref<8x128xf32, #tpu.memory_space<vmem>>, vector<1x32xf32>
    %c5 = arith.constant 5 : index
    %c0_7 = arith.constant 0 : index
    %6 = vector.load %arg6[%c5, %c0_7] : memref<8x128xf32, #tpu.memory_space<vmem>>, vector<1x32xf32>
    %c6 = arith.constant 6 : index
    %c0_8 = arith.constant 0 : index
    %7 = vector.load %arg6[%c6, %c0_8] : memref<8x128xf32, #tpu.memory_space<vmem>>, vector<1x64xf32>
    %c7 = arith.constant 7 : index
    %c0_9 = arith.constant 0 : index
    %8 = vector.load %arg6[%c7, %c0_9] : memref<8x128xf32, #tpu.memory_space<vmem>>, vector<1x32xf32>
    %cst = arith.constant dense<0.000000e+00> : vector<16xf32>
    %9 = vector.multi_reduction <add>, %0, %cst [1] : vector<16x32xf32> to vector<16xf32>
    %10 = vector.shape_cast %9 : vector<16xf32> to vector<16x1xf32>
    %cst_10 = arith.constant 3.200000e+01 : f32
    %11 = vector.broadcast %cst_10 : f32 to vector<16x1xf32>
    %12 = arith.divf %10, %11 : vector<16x1xf32>
    %13 = arith.mulf %0, %0 : vector<16x32xf32>
    %cst_11 = arith.constant dense<0.000000e+00> : vector<16xf32>
    %14 = vector.multi_reduction <add>, %13, %cst_11 [1] : vector<16x32xf32> to vector<16xf32>
    %15 = vector.shape_cast %14 : vector<16xf32> to vector<16x1xf32>
    %cst_12 = arith.constant 3.200000e+01 : f32
    %16 = vector.broadcast %cst_12 : f32 to vector<16x1xf32>
    %17 = arith.divf %15, %16 : vector<16x1xf32>
    %18 = arith.mulf %12, %12 : vector<16x1xf32>
    %19 = arith.subf %17, %18 : vector<16x1xf32>
    %20 = vector.broadcast %12 : vector<16x1xf32> to vector<16x32xf32>
    %21 = arith.subf %0, %20 : vector<16x32xf32>
    %cst_13 = arith.constant 9.99999974E-6 : f32
    %22 = vector.broadcast %cst_13 : f32 to vector<16x1xf32>
    %23 = arith.addf %19, %22 : vector<16x1xf32>
    %24 = math.rsqrt %23 : vector<16x1xf32>
    %25 = vector.broadcast %24 : vector<16x1xf32> to vector<16x32xf32>
    %26 = arith.mulf %21, %25 : vector<16x32xf32>
    %27 = vector.broadcast %3 : vector<1x32xf32> to vector<16x32xf32>
    %28 = arith.mulf %26, %27 : vector<16x32xf32>
    %29 = vector.broadcast %4 : vector<1x32xf32> to vector<16x32xf32>
    %30 = arith.addf %28, %29 : vector<16x32xf32>
    %c0_14 = arith.constant 0 : index
    %c0_15 = arith.constant 0 : index
    %31 = vector.load %arg2[%c0_14, %c0_15] : memref<32x96xbf16, #tpu.memory_space<vmem>>, vector<32x96xbf16>
    %32 = arith.truncf %30 : vector<16x32xf32> to vector<16x32xbf16>
    %cst_16 = arith.constant dense<0.000000e+00> : vector<16x96xf32>
    %33 = tpu.matmul %32, %31, %cst_16 {dimension_numbers = #tpu.dot_dimension_numbers<[1], [0], [0], [1], [0, 0, 1, 1], [], []>} : vector<16x32xbf16>, vector<32x96xbf16>, vector<16x96xf32> -> vector<16x96xf32>
    %34 = vector.broadcast %1 : vector<1x96xf32> to vector<16x96xf32>
    %35 = arith.addf %33, %34 : vector<16x96xf32>
    %36 = vector.extract_strided_slice %35 {offsets = [0, 0], sizes = [16, 32], strides = [1, 1]} : vector<16x96xf32> to vector<16x32xf32>
    %cst_17 = arith.constant 0.353553385 : f32
    %37 = vector.broadcast %cst_17 : f32 to vector<16x32xf32>
    %38 = arith.mulf %36, %37 : vector<16x32xf32>
    %39 = vector.extract_strided_slice %35 {offsets = [0, 32], sizes = [16, 32], strides = [1, 1]} : vector<16x96xf32> to vector<16x32xf32>
    %40 = vector.extract_strided_slice %35 {offsets = [0, 64], sizes = [16, 32], strides = [1, 1]} : vector<16x96xf32> to vector<16x32xf32>
    %c0_18 = arith.constant 0 : index
    %c0_19 = arith.constant 0 : index
    %41 = vector.load %arg7[%c0_18, %c0_19] : memref<64x32xf32, #tpu.memory_space<vmem>>, vector<64x32xf32>
    %42 = tpu.concatenate %39, %39, %39, %39 in 0 : vector<16x32xf32>, vector<16x32xf32>, vector<16x32xf32>, vector<16x32xf32> -> vector<64x32xf32>
    %43 = tpu.concatenate %40, %40, %40, %40 in 0 : vector<16x32xf32>, vector<16x32xf32>, vector<16x32xf32>, vector<16x32xf32> -> vector<64x32xf32>
    %44 = arith.mulf %42, %41 : vector<64x32xf32>
    %45 = arith.truncf %44 : vector<64x32xf32> to vector<64x32xbf16>
    %46 = arith.mulf %43, %41 : vector<64x32xf32>
    %47 = arith.truncf %46 : vector<64x32xf32> to vector<64x32xbf16>
    %48 = arith.truncf %38 : vector<16x32xf32> to vector<16x32xbf16>
    %cst_20 = arith.constant dense<0.000000e+00> : vector<16x64xf32>
    %49 = tpu.matmul %48, %45, %cst_20 {dimension_numbers = #tpu.dot_dimension_numbers<[1], [1], [0], [0], [0, 0, 1, 0], [], []>} : vector<16x32xbf16>, vector<64x32xbf16>, vector<16x64xf32> -> vector<16x64xf32>
    %c0_21 = arith.constant 0 : index
    %c0_22 = arith.constant 0 : index
    %50 = vector.load %arg1[%c0_21, %c0_22] : memref<16x64xf32, #tpu.memory_space<vmem>>, vector<16x64xf32>
    %51 = arith.addf %49, %50 : vector<16x64xf32>
    %cst_23 = arith.constant dense<0xFF800000> : vector<16xf32>
    %52 = vector.multi_reduction <maximumf>, %51, %cst_23 [1] : vector<16x64xf32> to vector<16xf32>
    %53 = vector.shape_cast %52 : vector<16xf32> to vector<16x1xf32>
    %54 = vector.broadcast %53 : vector<16x1xf32> to vector<16x64xf32>
    %55 = arith.subf %51, %54 : vector<16x64xf32>
    %56 = math.exp %55 : vector<16x64xf32>
    %57 = arith.truncf %56 : vector<16x64xf32> to vector<16x64xbf16>
    %c0_24 = arith.constant 0 : index
    %c0_25 = arith.constant 0 : index
    %58 = vector.load %arg8[%c0_24, %c0_25] : memref<64x64xbf16, #tpu.memory_space<vmem>>, vector<64x64xbf16>
    %cst_26 = arith.constant dense<0.000000e+00> : vector<16x64xf32>
    %59 = tpu.matmul %57, %58, %cst_26 {dimension_numbers = #tpu.dot_dimension_numbers<[1], [0], [0], [1], [0, 0, 1, 1], [], []>} : vector<16x64xbf16>, vector<64x64xbf16>, vector<16x64xf32> -> vector<16x64xf32>
    %60 = tpu.reciprocal %59 {approx = true} : vector<16x64xf32> -> vector<16x64xf32>
    %cst_27 = arith.constant 0.000000e+00 : f32
    %61 = vector.broadcast %cst_27 : f32 to vector<16x64xf32>
    %62 = arith.cmpf ogt, %59, %61 : vector<16x64xf32>
    %cst_28 = arith.constant 0.000000e+00 : f32
    %63 = vector.broadcast %cst_28 : f32 to vector<16x64xf32>
    %64 = arith.select %62, %60, %63 : vector<16x64xi1>, vector<16x64xf32>
    %65 = arith.mulf %56, %64 : vector<16x64xf32>
    %66 = arith.truncf %65 : vector<16x64xf32> to vector<16x64xbf16>
    %cst_29 = arith.constant dense<0.000000e+00> : vector<16x32xf32>
    %67 = tpu.matmul %66, %47, %cst_29 {dimension_numbers = #tpu.dot_dimension_numbers<[1], [0], [0], [1], [0, 0, 1, 1], [], []>} : vector<16x64xbf16>, vector<64x32xbf16>, vector<16x32xf32> -> vector<16x32xf32>
    %c0_30 = arith.constant 0 : index
    %c0_31 = arith.constant 0 : index
    %68 = vector.load %arg3[%c0_30, %c0_31] : memref<32x32xbf16, #tpu.memory_space<vmem>>, vector<32x32xbf16>
    %69 = arith.truncf %67 : vector<16x32xf32> to vector<16x32xbf16>
    %cst_32 = arith.constant dense<0.000000e+00> : vector<16x32xf32>
    %70 = tpu.matmul %69, %68, %cst_32 {dimension_numbers = #tpu.dot_dimension_numbers<[1], [0], [0], [1], [0, 0, 1, 1], [], []>} : vector<16x32xbf16>, vector<32x32xbf16>, vector<16x32xf32> -> vector<16x32xf32>
    %71 = arith.addf %0, %70 : vector<16x32xf32>
    %72 = vector.broadcast %2 : vector<1x32xf32> to vector<16x32xf32>
    %73 = arith.addf %71, %72 : vector<16x32xf32>
    %cst_33 = arith.constant dense<0.000000e+00> : vector<16xf32>
    %74 = vector.multi_reduction <add>, %73, %cst_33 [1] : vector<16x32xf32> to vector<16xf32>
    %75 = vector.shape_cast %74 : vector<16xf32> to vector<16x1xf32>
    %cst_34 = arith.constant 3.200000e+01 : f32
    %76 = vector.broadcast %cst_34 : f32 to vector<16x1xf32>
    %77 = arith.divf %75, %76 : vector<16x1xf32>
    %78 = arith.mulf %73, %73 : vector<16x32xf32>
    %cst_35 = arith.constant dense<0.000000e+00> : vector<16xf32>
    %79 = vector.multi_reduction <add>, %78, %cst_35 [1] : vector<16x32xf32> to vector<16xf32>
    %80 = vector.shape_cast %79 : vector<16xf32> to vector<16x1xf32>
    %cst_36 = arith.constant 3.200000e+01 : f32
    %81 = vector.broadcast %cst_36 : f32 to vector<16x1xf32>
    %82 = arith.divf %80, %81 : vector<16x1xf32>
    %83 = arith.mulf %77, %77 : vector<16x1xf32>
    %84 = arith.subf %82, %83 : vector<16x1xf32>
    %85 = vector.broadcast %77 : vector<16x1xf32> to vector<16x32xf32>
    %86 = arith.subf %73, %85 : vector<16x32xf32>
    %cst_37 = arith.constant 9.99999974E-6 : f32
    %87 = vector.broadcast %cst_37 : f32 to vector<16x1xf32>
    %88 = arith.addf %84, %87 : vector<16x1xf32>
    %89 = math.rsqrt %88 : vector<16x1xf32>
    %90 = vector.broadcast %89 : vector<16x1xf32> to vector<16x32xf32>
    %91 = arith.mulf %86, %90 : vector<16x32xf32>
    %92 = vector.broadcast %5 : vector<1x32xf32> to vector<16x32xf32>
    %93 = arith.mulf %91, %92 : vector<16x32xf32>
    %94 = vector.broadcast %6 : vector<1x32xf32> to vector<16x32xf32>
    %95 = arith.addf %93, %94 : vector<16x32xf32>
    %c0_38 = arith.constant 0 : index
    %c0_39 = arith.constant 0 : index
    %96 = vector.load %arg4[%c0_38, %c0_39] : memref<32x64xbf16, #tpu.memory_space<vmem>>, vector<32x64xbf16>
    %97 = arith.truncf %95 : vector<16x32xf32> to vector<16x32xbf16>
    %cst_40 = arith.constant dense<0.000000e+00> : vector<16x64xf32>
    %98 = tpu.matmul %97, %96, %cst_40 {dimension_numbers = #tpu.dot_dimension_numbers<[1], [0], [0], [1], [0, 0, 1, 1], [], []>} : vector<16x32xbf16>, vector<32x64xbf16>, vector<16x64xf32> -> vector<16x64xf32>
    %99 = vector.broadcast %7 : vector<1x64xf32> to vector<16x64xf32>
    %100 = arith.addf %98, %99 : vector<16x64xf32>
    %cst_41 = arith.constant 0.000000e+00 : f32
    %101 = vector.broadcast %cst_41 : f32 to vector<16x64xf32>
    %102 = arith.maximumf %100, %101 : vector<16x64xf32>
    %c0_42 = arith.constant 0 : index
    %c0_43 = arith.constant 0 : index
    %103 = vector.load %arg5[%c0_42, %c0_43] : memref<64x32xbf16, #tpu.memory_space<vmem>>, vector<64x32xbf16>
    %104 = arith.truncf %102 : vector<16x64xf32> to vector<16x64xbf16>
    %cst_44 = arith.constant dense<0.000000e+00> : vector<16x32xf32>
    %105 = tpu.matmul %104, %103, %cst_44 {dimension_numbers = #tpu.dot_dimension_numbers<[1], [0], [0], [1], [0, 0, 1, 1], [], []>} : vector<16x64xbf16>, vector<64x32xbf16>, vector<16x32xf32> -> vector<16x32xf32>
    %106 = arith.addf %73, %105 : vector<16x32xf32>
    %107 = vector.broadcast %8 : vector<1x32xf32> to vector<16x32xf32>
    %108 = arith.addf %106, %107 : vector<16x32xf32>
    %c0_45 = arith.constant 0 : index
    %c0_46 = arith.constant 0 : index
    %109 = vector.load %arg9[%c0_45, %c0_46] : memref<16x32xf32, #tpu.memory_space<vmem>>, vector<16x32xf32>
    tpu.vector_store %arg9[%c0_45, %c0_46], %108 {strides = array<i32>} : memref<16x32xf32, #tpu.memory_space<vmem>>, vector<16x32xf32>,
    return
  }
}

</mosaic_0001>

<llo_original>
// kernel: encoder_block.1
$region0: #{encoder_block.1}
  #allocation0 [shape = 'u32[]', space=smem, size = 0x4, offset = 0x4, fixed_abs, tag = 'smem constant byte address 0x4 - core index']
  #allocation1 [shape = 'u32[72,128]{1,0:T(1,128)}', space=vmem, size = 0x9000, scoped, tag = 'internal scratch']
  %s0 = inlined_call_operand.vmem [shape: f32[16,32], index: 0, kind: input, shape index: {}]
  %s1 = inlined_call_operand.vmem [shape: f32[16,64], index: 1, kind: input, shape index: {}]
  %s2 = inlined_call_operand.vmem [shape: bf16[32,96], index: 2, kind: input, shape index: {}]
  %s3 = inlined_call_operand.vmem [shape: bf16[32,32], index: 3, kind: input, shape index: {}]
  %s4 = inlined_call_operand.vmem [shape: bf16[32,64], index: 4, kind: input, shape index: {}]
  %s5 = inlined_call_operand.vmem [shape: bf16[64,32], index: 5, kind: input, shape index: {}]
  %s6 = inlined_call_operand.hbm [shape: f32[8,128], index: 6, kind: input, shape index: {}]
  %s7 = inlined_call_operand.vmem [shape: f32[64,32], index: 7, kind: input, shape index: {}]
  %s8 = inlined_call_operand.vmem [shape: bf16[64,64], index: 8, kind: input, shape index: {}]
  %s9 = inlined_call_operand.hbm [shape: f32[16,32], index: 9, kind: output, shape index: {}]
  %s10 = sld [smem:[#allocation0]]
  $region50: #{encoder_block.1} parent=0
    _
  %s12 = ssub.s32 1, %s10
  %s13 = scalar_select 0, %s12, %s10
  $region1: #{encoder_block.1} parent=0
    #allocation2 [shape = 'u8[4096]{0}', space=vmem, size = 0x1000, scoped, tag = 'input window, operand 6, single buffered']
    #allocation3 [shape = 's32[1]{0}', space=sflag, size = 0x4, scoped, tag = 'scoped memory for encoder_block.1']
    #allocation4 [shape = 's32[1]{0}', space=sflag, size = 0x4, scoped, tag = 'scoped memory for encoder_block.1']
    #allocation5 [shape = 'u8[8192]{0}', space=vmem, size = 0x2000, scoped, tag = 'output window, operand 0, single buffered']
    %14 = vsyncpa [#allocation3], 0
    %15 = vsyncpa [#allocation4], 0
    // Predicated region
    $region2: #{encoder_block.1} parent=1 // pred_check
      _
    $region3: #{encoder_block.1} parent=1 // pred_check_branch
      %17 = sbr.rel (0) target = $region5
    $region4: #{encoder_block.1} parent=1 // pred_region
      _
    $region5: #{encoder_block.1} parent=1 // pred_fallthru
      _
    // Predicated region
    $region6: #{encoder_block.1} parent=1 // pred_check
      _
    $region7: #{encoder_block.1} parent=1 // pred_check_branch
      %19 = sbr.rel (0) target = $region9
    $region8: #{encoder_block.1} parent=1 // pred_region
      _
    $region9: #{encoder_block.1} parent=1 // pred_fallthru
      _
    // Predicated region
    $region10: #{encoder_block.1} parent=1 // pred_check
      _
    $region11: #{encoder_block.1} parent=1 // pred_check_branch
      %21 = sbr.rel (0) target = $region13
    $region12: #{encoder_block.1} parent=1 // pred_region
      _
    $region13: #{encoder_block.1} parent=1 // pred_fallthru
      _
    // Predicated region
    $region14: #{encoder_block.1} parent=1 // pred_check
      _
    $region15: #{encoder_block.1} parent=1 // pred_check_branch
      %23 = sbr.rel (0) target = $region17
    $region16: #{encoder_block.1} parent=1 // pred_region
      _
    $region17: #{encoder_block.1} parent=1 // pred_fallthru
      _
    // Predicated region
    $region18: #{encoder_block.1} parent=1 // pred_check
      _
    $region19: #{encoder_block.1} parent=1 // pred_check_branch
      %25 = sbr.rel (0) target = $region21
    $region20: #{encoder_block.1} parent=1 // pred_region
      _
    $region21: #{encoder_block.1} parent=1 // pred_fallthru
      _
    // Predicated region
    $region22: #{encoder_block.1} parent=1 // pred_check
      _
    $region23: #{encoder_block.1} parent=1 // pred_check_branch
      %27 = sbr.rel (0) target = $region25
    $region24: #{encoder_block.1} parent=1 // pred_region
      _
    $region25: #{encoder_block.1} parent=1 // pred_fallthru
      _
    // Predicated region
    $region26: #{encoder_block.1} parent=1 // pred_check
      _
    $region27: #{encoder_block.1} parent=1 // pred_check_branch
      %29 = sbr.rel (0) target = $region29
    $region28: #{encoder_block.1} parent=1 // pred_region
      %31 = vsyncadd [#allocation3], 0
      %s33 = sshll.u32 %s6, 4
      %s34 = int_to_ptr.hbm [resolvable:$true] %s33
      %s35 = sshll.u32 [#allocation2], 4
      %s36 = int_to_ptr.vmem [resolvable:$true] %s35
      %38 = dma.hbm_to_vmem [thread:$0]  %s34, 128, %s36, [#allocation3]
    $region29: #{encoder_block.1} parent=1 // pred_fallthru
      _
    // Predicated region
    $region30: #{encoder_block.1} parent=1 // pred_check
      _
    $region31: #{encoder_block.1} parent=1 // pred_check_branch
      %40 = sbr.rel (0) target = $region33
    $region32: #{encoder_block.1} parent=1 // pred_region
      _
    $region33: #{encoder_block.1} parent=1 // pred_fallthru
      _
    // Predicated region
    $region34: #{encoder_block.1} parent=1 // pred_check
      _
    $region35: #{encoder_block.1} parent=1 // pred_check_branch
      %42 = sbr.rel (0) target = $region37
    $region36: #{encoder_block.1} parent=1 // pred_region
      _
    $region37: #{encoder_block.1} parent=1 // pred_fallthru
      _
    // Predicated region
    $region38: #{encoder_block.1} parent=1 // pred_check
      _
    $region39: #{encoder_block.1} parent=1 // pred_check_branch
      %44 = sbr.rel (0) target = $region41
    $region40: #{encoder_block.1} parent=1 // pred_region
      %46 = dma.done [#allocation3], 128
    $region41: #{encoder_block.1} parent=1 // pred_fallthru
      _
    %v48 = vld [vmem:[%s0] sm:$0xff]
    %v49 = vld [vmem:[%s0 + $0x8] sm:$0xff]
    %v50 = vld [vmem:[#allocation2] sm:$0x1]
    %v51 = vld [vmem:[#allocation2 + $0x1] sm:$0x1]
    %v52 = vld [vmem:[#allocation2 + $0x2] sm:$0x1]
    %v53 = vld [vmem:[#allocation2 + $0x3] sm:$0x1]
    %v54 = vld [vmem:[#allocation2 + $0x4] sm:$0x1]
    %v55 = vld [vmem:[#allocation2 + $0x5] sm:$0x1]
    %v56 = vld [vmem:[#allocation2 + $0x6] sm:$0x1]
    %v57 = vld [vmem:[#allocation2 + $0x7] sm:$0x1]
    %vm58 = vcmask 261120
    %v59 = vsel %vm58, %v48, 0.0
    %60 = vadd.xlane.f32.xlu0 %v59
    %v61 = vpop.xlane.xlu0 %60
    %v62 = vsel %vm58, %v49, 0.0
    %63 = vadd.xlane.f32.xlu0 %v62
    %v64 = vpop.xlane.xlu0 %63
    %v65 = vrcp.pop 32.0
    %v66 = vmul.f32 32.0, %v65
    %v67 = vsub.f32 1.0, %v66
    %v68 = vmul.f32 %v65, %v67
    %v69 = vadd.f32 %v65, %v68
    %vm70 = vweird.f32 %v65
    %v71 = vsel %vm70, %v65, %v69
    %v72 = vmul.f32 %v61, %v71
    %v73 = vmul.f32 %v64, %v71
    %v74 = vmul.f32 %v48, %v48
    %v75 = vmul.f32 %v49, %v49
    %v76 = vsel %vm58, %v74, 0.0
    %77 = vadd.xlane.f32.xlu0 %v76
    %v78 = vpop.xlane.xlu0 %77
    %v79 = vsel %vm58, %v75, 0.0
    %80 = vadd.xlane.f32.xlu0 %v79
    %v81 = vpop.xlane.xlu0 %80
    %v82 = vmul.f32 %v78, %v71
    %v83 = vmul.f32 %v81, %v71
    %v84 = vmul.f32 %v72, %v72
    %v85 = vmul.f32 %v73, %v73
    %v86 = vsub.f32 %v82, %v84
    %v87 = vsub.f32 %v83, %v85
    %v88 = vsub.f32 %v48, %v72
    %v89 = vsub.f32 %v49, %v73
    %v90 = vadd.f32 %v86, 1e-05
    %v91 = vadd.f32 %v87, 1e-05
    %v92 = vrsqrt.pop %v90
    %v93 = vmul.f32 %v92, %v90
    %v94 = vmul.f32 %v93, %v92
    %v95 = vmul.f32 0.5, %v94
    %v96 = vsub.f32 1.5, %v95
    %v97 = vmul.f32 %v92, %v96
    %vm98 = vweird.f32 %v90
    %vm99 = vweird.f32 %v92
    %vm100 = vmor %vm98, %vm99
    %v101 = vsel %vm100, %v92, %v97
    %v102 = vrsqrt.pop %v91
    %v103 = vmul.f32 %v102, %v91
    %v104 = vmul.f32 %v103, %v102
    %v105 = vmul.f32 0.5, %v104
    %v106 = vsub.f32 1.5, %v105
    %v107 = vmul.f32 %v102, %v106
    %vm108 = vweird.f32 %v91
    %vm109 = vweird.f32 %v102
    %vm110 = vmor %vm108, %vm109
    %v111 = vsel %vm110, %v102, %v107
    %v112 = vmul.f32 %v88, %v101
    %v113 = vmul.f32 %v89, %v111
    %v114 = vperm.slane %v52, 0
    %v115 = vmul.f32 %v112, %v114
    %v116 = vmul.f32 %v113, %v114
    %v117 = vperm.slane %v53, 0
    %v118 = vadd.f32 %v115, %v117
    %v119 = vadd.f32 %v116, %v117
    %v120 = vld [vmem:[%s2] sm:$0xf]
    %v121 = vld [vmem:[%s2 + $0x4] sm:$0xf]
    %v122 = vld [vmem:[%s2 + $0x8] sm:$0xf]
    %v123 = vld [vmem:[%s2 + $0xc] sm:$0xf]
    %v124 = vpack.c.bf16 %v119, %v118
    %v125 = vperm.slane %v50, 0
    %v130 = vunpack.c.l.b16 %v120
    %v131 = vunpack.c.l.b16 %v121
    %v132 = vunpack.c.l.b16 %v122
    %v133 = vunpack.c.l.b16 %v123
    %v134 = vpack.c.b16 %v131, %v130
    %v135 = vpack.c.b16 %v133, %v132
    %v139 = vsel %vm58, %v124, 0
    %141 = vmatpush.bf16.msra.mxu0 0
    %142 = vmatpush.bf16.msra.mxu0 0
    %143 = vmatpush.bf16.msra.mxu0 0
    %144 = vmatpush.bf16.msra.mxu0 0
    %145 = vmatpush.bf16.msra.mxu0 0
    %146 = vmatpush.bf16.msra.mxu0 0
    %147 = vmatpush.bf16.msra.mxu0 %v135
    %148 = vmatpush.bf16.msra.mxu0 %v134
    %149 = vmatmul.bf16.gmra.mxu0 %v139
    %v150 = vpop.f32.mrf.mxu0
    %v151 = vadd.f32 %v125, %v150
    %v152 = vpop.f32.mrf.mxu0
    %v153 = vadd.f32 %v125, %v152
    %154 = vdwg.mxu0
    %v155 = vmul.f32 %v151, 0.35355338
    %v156 = vmul.f32 %v153, 0.35355338
    %v157 = vld [vmem:[%s7] sm:$0xff]
    %v158 = vld [vmem:[%s7 + $0x8] sm:$0xff]
    %v159 = vld [vmem:[%s7 + $0x10] sm:$0xff]
    %v160 = vld [vmem:[%s7 + $0x18] sm:$0xff]
    %v161 = vld [vmem:[%s7 + $0x20] sm:$0xff]
    %v162 = vld [vmem:[%s7 + $0x28] sm:$0xff]
    %v163 = vld [vmem:[%s7 + $0x30] sm:$0xff]
    %v164 = vld [vmem:[%s7 + $0x38] sm:$0xff]
    %173 = vrot.lane.b32.xlu0 %v157, 32
    %v174 = vpop.permute.xlu0 %173
    %175 = vrot.lane.b32.xlu0 %v158, 32
    %v176 = vpop.permute.xlu0 %175
    %177 = vrot.lane.b32.xlu0 %v159, 32
    %v178 = vpop.permute.xlu0 %177
    %179 = vrot.lane.b32.xlu0 %v160, 32
    %v180 = vpop.permute.xlu0 %179
    %181 = vrot.lane.b32.xlu0 %v161, 32
    %v182 = vpop.permute.xlu0 %181
    %183 = vrot.lane.b32.xlu0 %v162, 32
    %v184 = vpop.permute.xlu0 %183
    %185 = vrot.lane.b32.xlu0 %v163, 32
    %v186 = vpop.permute.xlu0 %185
    %187 = vrot.lane.b32.xlu0 %v164, 32
    %v188 = vpop.permute.xlu0 %187
    %v197 = vmul.f32 %v151, %v174
    %v198 = vmul.f32 %v153, %v176
    %v199 = vmul.f32 %v151, %v178
    %v200 = vmul.f32 %v153, %v180
    %v201 = vmul.f32 %v151, %v182
    %v202 = vmul.f32 %v153, %v184
    %v203 = vmul.f32 %v151, %v186
    %v204 = vmul.f32 %v153, %v188
    %v205 = vpack.c.bf16 %v198, %v197
    %v206 = vpack.c.bf16 %v200, %v199
    %v207 = vpack.c.bf16 %v202, %v201
    %v208 = vpack.c.bf16 %v204, %v203
    %209 = vrot.lane.b32.xlu0 %v157, 64
    %v210 = vpop.permute.xlu0 %209
    %211 = vrot.lane.b32.xlu0 %v158, 64
    %v212 = vpop.permute.xlu0 %211
    %213 = vrot.lane.b32.xlu0 %v159, 64
    %v214 = vpop.permute.xlu0 %213
    %215 = vrot.lane.b32.xlu0 %v160, 64
    %v216 = vpop.permute.xlu0 %215
    %217 = vrot.lane.b32.xlu0 %v161, 64
    %v218 = vpop.permute.xlu0 %217
    %219 = vrot.lane.b32.xlu0 %v162, 64
    %v220 = vpop.permute.xlu0 %219
    %221 = vrot.lane.b32.xlu0 %v163, 64
    %v222 = vpop.permute.xlu0 %221
    %223 = vrot.lane.b32.xlu0 %v164, 64
    %v224 = vpop.permute.xlu0 %223
    %v233 = vmul.f32 %v151, %v210
    %v234 = vmul.f32 %v153, %v212
    %v235 = vmul.f32 %v151, %v214
    %v236 = vmul.f32 %v153, %v216
    %v237 = vmul.f32 %v151, %v218
    %v238 = vmul.f32 %v153, %v220
    %v239 = vmul.f32 %v151, %v222
    %v240 = vmul.f32 %v153, %v224
    %v241 = vpack.c.bf16 %v234, %v233
    %v242 = vpack.c.bf16 %v236, %v235
    %v243 = vpack.c.bf16 %v238, %v237
    %v244 = vpack.c.bf16 %v240, %v239
    %v245 = vpack.c.bf16 %v156, %v155
    %v246 = vld [vmem:[%s1] sm:$0xff]
    %v247 = vld [vmem:[%s1 + $0x8] sm:$0xff]
    %252 = vrot.lane.b32.xlu0 %v205, 96
    %v253 = vpop.permute.xlu0 %252
    %254 = vrot.lane.b32.xlu0 %v206, 96
    %v255 = vpop.permute.xlu0 %254
    %256 = vrot.lane.b32.xlu0 %v207, 96
    %v257 = vpop.permute.xlu0 %256
    %258 = vrot.lane.b32.xlu0 %v208, 96
    %v259 = vpop.permute.xlu0 %258
    %v261 = vsel %vm58, %v245, 0
    %v264 = vsel %vm58, %v253, 0
    %v267 = vsel %vm58, %v255, 0
    %v270 = vsel %vm58, %v257, 0
    %v273 = vsel %vm58, %v259, 0
    %275 = vmatpush.bf16.xpose.msra.mxu0 0
    %276 = vmatpush.bf16.xpose.msra.mxu0 0
    %277 = vmatpush.bf16.xpose.msra.mxu0 0
    %278 = vmatpush.bf16.xpose.msra.mxu0 0
    %279 = vmatpush.bf16.xpose.msra.mxu0 %v273
    %280 = vmatpush.bf16.xpose.msra.mxu0 %v270
    %281 = vmatpush.bf16.xpose.msra.mxu0 %v267
    %282 = vmatpush.bf16.xpose.msra.mxu0 %v264
    %283 = vmatmul.bf16.gmra.mxu0 %v261
    %v284 = vpop.f32.mrf.mxu0
    %v285 = vadd.f32 %v246, %v284
    %v286 = vpop.f32.mrf.mxu0
    %v287 = vadd.f32 %v247, %v286
    %288 = vdwg.mxu0
    %vm289 = vcmask 523264
    %v290 = vsel %vm289, %v285, -inf
    %291 = vmax.xlane.f32.xlu0 %v290
    %v292 = vpop.xlane.xlu0 %291
    %v293 = vsel %vm289, %v287, -inf
    %294 = vmax.xlane.f32.xlu0 %v293
    %v295 = vpop.xlane.xlu0 %294
    %v296 = vsub.f32 %v285, %v292
    %v297 = vsub.f32 %v287, %v295
    %v298 = vmul.f32 %v296, 1.442695
    %v299 = vpow.pop %v298
    %v300 = vmul.f32 %v297, 1.442695
    %v301 = vpow.pop %v300
    %v302 = vpack.c.bf16 %v301, %v299
    %v303 = vld [vmem:[%s8] sm:$0xf]
    %v304 = vld [vmem:[%s8 + $0x4] sm:$0xf]
    %v305 = vld [vmem:[%s8 + $0x8] sm:$0xf]
    %v306 = vld [vmem:[%s8 + $0xc] sm:$0xf]
    %v307 = vld [vmem:[%s8 + $0x10] sm:$0xf]
    %v308 = vld [vmem:[%s8 + $0x14] sm:$0xf]
    %v309 = vld [vmem:[%s8 + $0x18] sm:$0xf]
    %v310 = vld [vmem:[%s8 + $0x1c] sm:$0xf]
    %v319 = vunpack.c.l.b16 %v303
    %v320 = vunpack.c.l.b16 %v304
    %v321 = vunpack.c.l.b16 %v305
    %v322 = vunpack.c.l.b16 %v306
    %v323 = vunpack.c.l.b16 %v307
    %v324 = vunpack.c.l.b16 %v308
    %v325 = vunpack.c.l.b16 %v309
    %v326 = vunpack.c.l.b16 %v310
    %v327 = vpack.c.b16 %v320, %v319
    %v328 = vpack.c.b16 %v322, %v321
    %v329 = vpack.c.b16 %v324, %v323
    %v330 = vpack.c.b16 %v326, %v325
    %v336 = vsel %vm289, %v302, 0
    %338 = vmatpush.bf16.msra.mxu0 0
    %339 = vmatpush.bf16.msra.mxu0 0
    %340 = vmatpush.bf16.msra.mxu0 0
    %341 = vmatpush.bf16.msra.mxu0 0
    %342 = vmatpush.bf16.msra.mxu0 %v330
    %343 = vmatpush.bf16.msra.mxu0 %v329
    %344 = vmatpush.bf16.msra.mxu0 %v328
    %345 = vmatpush.bf16.msra.mxu0 %v327
    %346 = vmatmul.bf16.gmra.mxu0 %v336
    %v347 = vpop.f32.mrf.mxu0
    %v348 = vadd.f32 0.0, %v347
    %v349 = vpop.f32.mrf.mxu0
    %v350 = vadd.f32 0.0, %v349
    %351 = vdwg.mxu0
    %v352 = vrcp.pop %v348
    %v353 = vrcp.pop %v350
    %vm354 = vcmp.gt.f32.partialorder %v348, 0.0
    %vm355 = vcmp.gt.f32.partialorder %v350, 0.0
    %v356 = vsel %vm354, %v352, 0.0
    %v357 = vsel %vm355, %v353, 0.0
    %v358 = vmul.f32 %v299, %v356
    %v359 = vmul.f32 %v301, %v357
    %v360 = vpack.c.bf16 %v359, %v358
    %365 = vrot.lane.b32.xlu0 %v241, 64
    %v366 = vpop.permute.xlu0 %365
    %367 = vrot.lane.b32.xlu0 %v242, 64
    %v368 = vpop.permute.xlu0 %367
    %369 = vrot.lane.b32.xlu0 %v243, 64
    %v370 = vpop.permute.xlu0 %369
    %371 = vrot.lane.b32.xlu0 %v244, 64
    %v372 = vpop.permute.xlu0 %371
    %v378 = vsel %vm289, %v360, 0
    %380 = vmatpush.bf16.msra.mxu0 0
    %381 = vmatpush.bf16.msra.mxu0 0
    %382 = vmatpush.bf16.msra.mxu0 0
    %383 = vmatpush.bf16.msra.mxu0 0
    %384 = vmatpush.bf16.msra.mxu0 %v372
    %385 = vmatpush.bf16.msra.mxu0 %v370
    %386 = vmatpush.bf16.msra.mxu0 %v368
    %387 = vmatpush.bf16.msra.mxu0 %v366
    %388 = vmatmul.bf16.gmra.mxu0 %v378
    %v389 = vpop.f32.mrf.mxu0
    %v390 = vadd.f32 0.0, %v389
    %v391 = vpop.f32.mrf.mxu0
    %v392 = vadd.f32 0.0, %v391
    %393 = vdwg.mxu0
    %v394 = vld [vmem:[%s3] sm:$0xf]
    %v395 = vld [vmem:[%s3 + $0x4] sm:$0xf]
    %v396 = vld [vmem:[%s3 + $0x8] sm:$0xf]
    %v397 = vld [vmem:[%s3 + $0xc] sm:$0xf]
    %v398 = vpack.c.bf16 %v392, %v390
    %v403 = vunpack.c.l.b16 %v394
    %v404 = vunpack.c.l.b16 %v395
    %v405 = vunpack.c.l.b16 %v396
    %v406 = vunpack.c.l.b16 %v397
    %v407 = vpack.c.b16 %v404, %v403
    %v408 = vpack.c.b16 %v406, %v405
    %v412 = vsel %vm58, %v398, 0
    %414 = vmatpush.bf16.msra.mxu0 0
    %415 = vmatpush.bf16.msra.mxu0 0
    %416 = vmatpush.bf16.msra.mxu0 0
    %417 = vmatpush.bf16.msra.mxu0 0
    %418 = vmatpush.bf16.msra.mxu0 0
    %419 = vmatpush.bf16.msra.mxu0 0
    %420 = vmatpush.bf16.msra.mxu0 %v408
    %421 = vmatpush.bf16.msra.mxu0 %v407
    %422 = vmatmul.bf16.gmra.mxu0 %v412
    %v423 = vpop.f32.mrf.mxu0
    %v424 = vadd.f32 0.0, %v423
    %v425 = vpop.f32.mrf.mxu0
    %v426 = vadd.f32 0.0, %v425
    %427 = vdwg.mxu0
    %v428 = vadd.f32 %v48, %v424
    %v429 = vadd.f32 %v49, %v426
    %v430 = vperm.slane %v51, 0
    %v431 = vadd.f32 %v428, %v430
    %v432 = vadd.f32 %v429, %v430
    %v433 = vsel %vm58, %v431, 0.0
    %434 = vadd.xlane.f32.xlu0 %v433
    %v435 = vpop.xlane.xlu0 %434
    %v436 = vsel %vm58, %v432, 0.0
    %437 = vadd.xlane.f32.xlu0 %v436
    %v438 = vpop.xlane.xlu0 %437
    %v439 = vmul.f32 %v435, %v71
    %v440 = vmul.f32 %v438, %v71
    %v441 = vmul.f32 %v431, %v431
    %v442 = vmul.f32 %v432, %v432
    %v443 = vsel %vm58, %v441, 0.0
    %444 = vadd.xlane.f32.xlu0 %v443
    %v445 = vpop.xlane.xlu0 %444
    %v446 = vsel %vm58, %v442, 0.0
    %447 = vadd.xlane.f32.xlu0 %v446
    %v448 = vpop.xlane.xlu0 %447
    %v449 = vmul.f32 %v445, %v71
    %v450 = vmul.f32 %v448, %v71
    %v451 = vmul.f32 %v439, %v439
    %v452 = vmul.f32 %v440, %v440
    %v453 = vsub.f32 %v449, %v451
    %v454 = vsub.f32 %v450, %v452
    %v455 = vsub.f32 %v431, %v439
    %v456 = vsub.f32 %v432, %v440
    %v457 = vadd.f32 %v453, 1e-05
    %v458 = vadd.f32 %v454, 1e-05
    %v459 = vrsqrt.pop %v457
    %v460 = vmul.f32 %v459, %v457
    %v461 = vmul.f32 %v460, %v459
    %v462 = vmul.f32 0.5, %v461
    %v463 = vsub.f32 1.5, %v462
    %v464 = vmul.f32 %v459, %v463
    %vm465 = vweird.f32 %v457
    %vm466 = vweird.f32 %v459
    %vm467 = vmor %vm465, %vm466
    %v468 = vsel %vm467, %v459, %v464
    %v469 = vrsqrt.pop %v458
    %v470 = vmul.f32 %v469, %v458
    %v471 = vmul.f32 %v470, %v469
    %v472 = vmul.f32 0.5, %v471
    %v473 = vsub.f32 1.5, %v472
    %v474 = vmul.f32 %v469, %v473
    %vm475 = vweird.f32 %v458
    %vm476 = vweird.f32 %v469
    %vm477 = vmor %vm475, %vm476
    %v478 = vsel %vm477, %v469, %v474
    %v479 = vmul.f32 %v455, %v468
    %v480 = vmul.f32 %v456, %v478
    %v481 = vperm.slane %v54, 0
    %v482 = vmul.f32 %v479, %v481
    %v483 = vmul.f32 %v480, %v481
    %v484 = vperm.slane %v55, 0
    %v485 = vadd.f32 %v482, %v484
    %v486 = vadd.f32 %v483, %v484
    %v487 = vld [vmem:[%s4] sm:$0xf]
    %v488 = vld [vmem:[%s4 + $0x4] sm:$0xf]
    %v489 = vld [vmem:[%s4 + $0x8] sm:$0xf]
    %v490 = vld [vmem:[%s4 + $0xc] sm:$0xf]
    %v491 = vpack.c.bf16 %v486, %v485
    %v492 = vperm.slane %v56, 0
    %v497 = vunpack.c.l.b16 %v487
    %v498 = vunpack.c.l.b16 %v488
    %v499 = vunpack.c.l.b16 %v489
    %v500 = vunpack.c.l.b16 %v490
    %v501 = vpack.c.b16 %v498, %v497
    %v502 = vpack.c.b16 %v500, %v499
    %v506 = vsel %vm58, %v491, 0
    %508 = vmatpush.bf16.msra.mxu0 0
    %509 = vmatpush.bf16.msra.mxu0 0
    %510 = vmatpush.bf16.msra.mxu0 0
    %511 = vmatpush.bf16.msra.mxu0 0
    %512 = vmatpush.bf16.msra.mxu0 0
    %513 = vmatpush.bf16.msra.mxu0 0
    %514 = vmatpush.bf16.msra.mxu0 %v502
    %515 = vmatpush.bf16.msra.mxu0 %v501
    %516 = vmatmul.bf16.gmra.mxu0 %v506
    %v517 = vpop.f32.mrf.mxu0
    %v518 = vadd.f32 %v492, %v517
    %v519 = vpop.f32.mrf.mxu0
    %v520 = vadd.f32 %v492, %v519
    %521 = vdwg.mxu0
    %v522 = vmax.f32 %v518, 0.0
    %v523 = vmax.f32 %v520, 0.0
    %v524 = vld [vmem:[%s5] sm:$0xf]
    %v525 = vld [vmem:[%s5 + $0x4] sm:$0xf]
    %v526 = vld [vmem:[%s5 + $0x8] sm:$0xf]
    %v527 = vld [vmem:[%s5 + $0xc] sm:$0xf]
    %v528 = vld [vmem:[%s5 + $0x10] sm:$0xf]
    %v529 = vld [vmem:[%s5 + $0x14] sm:$0xf]
    %v530 = vld [vmem:[%s5 + $0x18] sm:$0xf]
    %v531 = vld [vmem:[%s5 + $0x1c] sm:$0xf]
    %v532 = vpack.c.bf16 %v523, %v522
    %v541 = vunpack.c.l.b16 %v524
    %v542 = vunpack.c.l.b16 %v525
    %v543 = vunpack.c.l.b16 %v526
    %v544 = vunpack.c.l.b16 %v527
    %v545 = vunpack.c.l.b16 %v528
    %v546 = vunpack.c.l.b16 %v529
    %v547 = vunpack.c.l.b16 %v530
    %v548 = vunpack.c.l.b16 %v531
    %v549 = vpack.c.b16 %v542, %v541
    %v550 = vpack.c.b16 %v544, %v543
    %v551 = vpack.c.b16 %v546, %v545
    %v552 = vpack.c.b16 %v548, %v547
    %v558 = vsel %vm289, %v532, 0
    %560 = vmatpush.bf16.msra.mxu0 0
    %561 = vmatpush.bf16.msra.mxu0 0
    %562 = vmatpush.bf16.msra.mxu0 0
    %563 = vmatpush.bf16.msra.mxu0 0
    %564 = vmatpush.bf16.msra.mxu0 %v552
    %565 = vmatpush.bf16.msra.mxu0 %v551
    %566 = vmatpush.bf16.msra.mxu0 %v550
    %567 = vmatpush.bf16.msra.mxu0 %v549
    %568 = vmatmul.bf16.gmra.mxu0 %v558
    %v569 = vpop.f32.mrf.mxu0
    %v570 = vadd.f32 0.0, %v569
    %v571 = vpop.f32.mrf.mxu0
    %v572 = vadd.f32 0.0, %v571
    %573 = vdwg.mxu0
    %v574 = vadd.f32 %v431, %v570
    %v575 = vadd.f32 %v432, %v572
    %v576 = vperm.slane %v57, 0
    %v577 = vadd.f32 %v574, %v576
    %v578 = vadd.f32 %v575, %v576
    %579 = vst.msk [vmem:[#allocation5] sm:$0xff] %vm58, %v577
    %580 = vst.msk [vmem:[#allocation5 + $0x8] sm:$0xff] %vm58, %v578
    // Predicated region
    $region42: #{encoder_block.1} parent=1 // pred_check
      _
    $region43: #{encoder_block.1} parent=1 // pred_check_branch
      %582 = sbr.rel (0) target = $region45
    $region44: #{encoder_block.1} parent=1 // pred_region
      %584 = vsyncadd [#allocation4], 0
      %s585 = sshll.u32 [#allocation5], 4
      %s586 = int_to_ptr.vmem [resolvable:$true] %s585
      %s587 = sshll.u32 %s9, 4
      %s588 = int_to_ptr.hbm [resolvable:$true] %s587
      %593 = dma.vmem_to_hbm [thread:$0]  %s586, 256, %s588, [#allocation4], 128, 128, 8
    $region45: #{encoder_block.1} parent=1 // pred_fallthru
      _
    // Predicated region
    $region46: #{encoder_block.1} parent=1 // pred_check
      _
    $region47: #{encoder_block.1} parent=1 // pred_check_branch
      %595 = sbr.rel (0) target = $region49
    $region48: #{encoder_block.1} parent=1 // pred_region
      %597 = dma.done [#allocation4], 256
    $region49: #{encoder_block.1} parent=1 // pred_fallthru
      _
    %598 = vsyncpa [#allocation3], 1
    %599 = vsyncpa [#allocation4], 1

</llo_original>
